<compile_context>
chip_gen: v5e
topology: v5e:2x2
jax: 0.10.0
libtpu: 0.0.40
codegen_flags: <defaults>
</compile_context>

<pallas_src>
import jax
import jax.numpy as jnp
from jax.experimental import pallas as pl
from jax.experimental.pallas import tpu as pltpu

_N_LAYERS = 7     # 2 mlp layers + 5 net layers
_FEAT = 128       # every feature dim is zero-padded to 128 lanes


def _round_up(x, m):
    return ((x + m - 1) // m) * m


def _vggish_demo_kernel(x_ref, w_ref, b_ref, out_ref):
    """x_ref: [TM,128] f32, w_ref: [7,128,128] bf16, b_ref: [8,128] f32,
    out_ref: [TM,128] f32 softmax (padded class lanes are exactly 0)."""
    # In-kernel f32 -> bf16 cast (removes a wrapper-side HBM read+write pass).
    h = x_ref[...].astype(jnp.bfloat16)                         # bf16 [TM,128]

    # Hidden layers: Linear + ReLU (f32 accumulate, bf16 fed back to the MXU).
    for i in range(_N_LAYERS - 1):
        acc = jnp.dot(h, w_ref[i], preferred_element_type=jnp.float32)
        acc = acc + b_ref[pl.ds(i, 1), :]
        h = jnp.maximum(acc, 0.0).astype(jnp.bfloat16)

    # Output layer. Padded class lanes carry a -1e30 bias, so after the
    # max-subtracted exp they contribute exactly 0 to the softmax sum.
    logits = jnp.dot(h, w_ref[_N_LAYERS - 1],
                     preferred_element_type=jnp.float32)
    logits = logits + b_ref[pl.ds(_N_LAYERS - 1, 1), :]

    m = jnp.max(logits, axis=1, keepdims=True)
    e = jnp.exp(logits - m)
    denom = jnp.sum(e, axis=1, keepdims=True)
    out_ref[...] = e * pl.reciprocal(denom, approx=True)


def pack_params(params, n_classes):
    """Zero-pad each Linear to 128x128 / 128-wide bias and pack into two buffers."""
    assert len(params) == _N_LAYERS
    w_pack = jnp.zeros((_N_LAYERS, _FEAT, _FEAT), jnp.float32)
    b_pack = jnp.zeros((8, _FEAT), jnp.float32)   # 8 rows = one (8,128) tile
    for i, (w, b) in enumerate(params):
        d_in, d_out = w.shape
        w_pack = w_pack.at[i, :d_in, :d_out].set(w)
        b_pack = b_pack.at[i, :d_out].set(jnp.reshape(b, (-1,)))
    # Kill padded class lanes of the final layer via a very negative bias.
    b_pack = b_pack.at[_N_LAYERS - 1, n_classes:].set(-1e30)
    return w_pack.astype(jnp.bfloat16), b_pack


def sound_vggish_demo_forward(x, params, n_classes=10, tm=1024):
    """x: [B,128] f32. params: 7 (W[in,out], b[1,out]) pairs, mlp first then net."""
    B, d = x.shape
    assert d == _FEAT
    w_pack, b_pack = pack_params(params, n_classes)

    # Adaptive tile: never pad a tiny batch up to a full throughput tile
    # (16-row granule = bf16 sublane pack; 8 suffices for the f32 blocks).
    tm = min(tm, _round_up(B, 16))
    # v7x has 2 TensorCores: for non-tiny batches cap TM so the grid has at
    # least 2 steps; "parallel" lets the runtime shard them across cores.
    if B >= 32:
        tm = min(tm, _round_up(pl.cdiv(B, 2), 16))
    tm = max(tm, 16)

    b_pad = pl.cdiv(B, tm) * tm
    x_in = x if b_pad == B else jnp.pad(x, ((0, b_pad - B), (0, 0)))

    out = pl.pallas_call(
        _vggish_demo_kernel,
        out_shape=jax.ShapeDtypeStruct((b_pad, _FEAT), jnp.float32),
        grid_spec=pltpu.PrefetchScalarGridSpec(
            num_scalar_prefetch=0,
            grid=(b_pad // tm,),
            in_specs=[
                # batch tile of activations (f32, cast to bf16 in-kernel)
                pl.BlockSpec((tm, _FEAT), lambda i: (i, 0)),
                # packed weights: constant index_map -> VMEM-resident, and
                # single-buffered (no second 224 KiB pipeline buffer).
                pl.BlockSpec((_N_LAYERS, _FEAT, _FEAT), lambda i: (0, 0, 0),
                             pipeline_mode=pl.Buffered(1)),
                # packed biases: same treatment.
                pl.BlockSpec((8, _FEAT), lambda i: (0, 0),
                             pipeline_mode=pl.Buffered(1)),
            ],
            out_specs=pl.BlockSpec((tm, _FEAT), lambda i: (i, 0)),
        ),
        compiler_params=pltpu.CompilerParams(
            dimension_semantics=("parallel",)),
    )(x_in, w_pack, b_pack)
    return out[:B, :n_classes]


def make_params(key, n_classes=10):
    """Deterministic synthetic parameters; PyTorch Linear shapes transposed to [in,out]."""
    dims = [
        (128, 128), (128, 128),                      # mlp
        (128, 100), (100, 80), (80, 50), (50, 25),   # net hidden
        (25, n_classes),                             # net output
    ]
    params = []
    for i, (d_in, d_out) in enumerate(dims):
        kw, kb = jax.random.split(jax.random.fold_in(key, i))
        bound = 1.0 / jnp.sqrt(d_in)
        w = jax.random.uniform(kw, (d_in, d_out), jnp.float32, -bound, bound)
        b = jax.random.uniform(kb, (1, d_out), jnp.float32, -bound, bound)
        params.append((w, b))
    return params


def reference_forward(x, params):
    h = x
    for w, b in params[:-1]:
        h = jnp.maximum(h @ w + b, 0.0)
    w, b = params[-1]
    return jax.nn.softmax(h @ w + b, axis=1)


if __name__ == "__main__":
    key = jax.random.PRNGKey(0)
    k_x, k_p = jax.random.split(key)

    n_classes = 10
    params = make_params(k_p, n_classes=n_classes)

    # Small demo batch (single-tile path) and an unaligned batch that
    # exercises padding + a 2-step grid.
    for B in (8, 40):
        x = jax.random.normal(jax.random.fold_in(k_x, B), (B, 128), jnp.float32)
        out = jax.block_until_ready(
            sound_vggish_demo_forward(x, params, n_classes=n_classes))
        ref = reference_forward(x, params)

        assert out.shape == (B, n_classes)
        # Softmax rows must still sum to ~1 (approx reciprocal rel err ~2e-4).
        assert jnp.allclose(jnp.sum(out, axis=1), 1.0, atol=5e-3)
        # bf16 MXU inputs + approx reciprocal => loosened tolerance vs f32 ref.
        assert jnp.allclose(out, ref, atol=5e-2), float(jnp.max(jnp.abs(out - ref)))

    print("KERNEL_OK")
</pallas_src>

<mosaic_0001>
module attributes {stable_mosaic.version = 11 : i64} {
  func.func @_vggish_demo_kernel(%arg0: i32, %arg1: memref<16x128xf32, #tpu.memory_space<vmem>>, %arg2: memref<7x128x128xbf16, #tpu.memory_space<vmem>>, %arg3: memref<8x128xf32, #tpu.memory_space<vmem>>, %arg4: memref<16x128xf32, #tpu.memory_space<vmem>>) attributes {dimension_semantics = [#tpu.dimension_semantics<parallel>], iteration_bounds = array<i64: 1>, scalar_prefetch = 0 : i64, scratch_operands = 0 : i64, tpu.core_type = #tpu.core_type<tc>, window_params = [{transform_indices = @transform_0, window_bounds = array<i64: 16, 128>}, {pipeline_mode = #tpu.pipeline_mode<synchronous>, transform_indices = @transform_1, window_bounds = array<i64: 7, 128, 128>}, {pipeline_mode = #tpu.pipeline_mode<synchronous>, transform_indices = @transform_2, window_bounds = array<i64: 8, 128>}, {transform_indices = @transform_3, window_bounds = array<i64: 16, 128>}]} {
    %c0 = arith.constant 0 : index
    %c0_0 = arith.constant 0 : index
    %0 = vector.load %arg1[%c0, %c0_0] : memref<16x128xf32, #tpu.memory_space<vmem>>, vector<16x128xf32>
    %1 = arith.truncf %0 : vector<16x128xf32> to vector<16x128xbf16>
    %c0_1 = arith.constant 0 : index
    %c0_2 = arith.constant 0 : index
    %c0_3 = arith.constant 0 : index
    %2 = vector.load %arg2[%c0_1, %c0_2, %c0_3] : memref<7x128x128xbf16, #tpu.memory_space<vmem>>, vector<1x128x128xbf16>
    %3 = vector.shape_cast %2 : vector<1x128x128xbf16> to vector<128x128xbf16>
    %cst = arith.constant dense<0.000000e+00> : vector<16x128xf32>
    %4 = tpu.matmul %1, %3, %cst {dimension_numbers = #tpu.dot_dimension_numbers<[1], [0], [0], [1], [0, 0, 1, 1], [], []>} : vector<16x128xbf16>, vector<128x128xbf16>, vector<16x128xf32> -> vector<16x128xf32>
    %c0_4 = arith.constant 0 : index
    %c0_5 = arith.constant 0 : index
    %5 = vector.load %arg3[%c0_4, %c0_5] : memref<8x128xf32, #tpu.memory_space<vmem>>, vector<1x128xf32>
    %6 = vector.broadcast %5 : vector<1x128xf32> to vector<16x128xf32>
    %7 = arith.addf %4, %6 : vector<16x128xf32>
    %cst_6 = arith.constant 0.000000e+00 : f32
    %8 = vector.broadcast %cst_6 : f32 to vector<16x128xf32>
    %9 = arith.maximumf %7, %8 : vector<16x128xf32>
    %10 = arith.truncf %9 : vector<16x128xf32> to vector<16x128xbf16>
    %c1 = arith.constant 1 : index
    %c0_7 = arith.constant 0 : index
    %c0_8 = arith.constant 0 : index
    %11 = vector.load %arg2[%c1, %c0_7, %c0_8] : memref<7x128x128xbf16, #tpu.memory_space<vmem>>, vector<1x128x128xbf16>
    %12 = vector.shape_cast %11 : vector<1x128x128xbf16> to vector<128x128xbf16>
    %cst_9 = arith.constant dense<0.000000e+00> : vector<16x128xf32>
    %13 = tpu.matmul %10, %12, %cst_9 {dimension_numbers = #tpu.dot_dimension_numbers<[1], [0], [0], [1], [0, 0, 1, 1], [], []>} : vector<16x128xbf16>, vector<128x128xbf16>, vector<16x128xf32> -> vector<16x128xf32>
    %c1_10 = arith.constant 1 : index
    %c0_11 = arith.constant 0 : index
    %14 = vector.load %arg3[%c1_10, %c0_11] : memref<8x128xf32, #tpu.memory_space<vmem>>, vector<1x128xf32>
    %15 = vector.broadcast %14 : vector<1x128xf32> to vector<16x128xf32>
    %16 = arith.addf %13, %15 : vector<16x128xf32>
    %cst_12 = arith.constant 0.000000e+00 : f32
    %17 = vector.broadcast %cst_12 : f32 to vector<16x128xf32>
    %18 = arith.maximumf %16, %17 : vector<16x128xf32>
    %19 = arith.truncf %18 : vector<16x128xf32> to vector<16x128xbf16>
    %c2 = arith.constant 2 : index
    %c0_13 = arith.constant 0 : index
    %c0_14 = arith.constant 0 : index
    %20 = vector.load %arg2[%c2, %c0_13, %c0_14] : memref<7x128x128xbf16, #tpu.memory_space<vmem>>, vector<1x128x128xbf16>
    %21 = vector.shape_cast %20 : vector<1x128x128xbf16> to vector<128x128xbf16>
    %cst_15 = arith.constant dense<0.000000e+00> : vector<16x128xf32>
    %22 = tpu.matmul %19, %21, %cst_15 {dimension_numbers = #tpu.dot_dimension_numbers<[1], [0], [0], [1], [0, 0, 1, 1], [], []>} : vector<16x128xbf16>, vector<128x128xbf16>, vector<16x128xf32> -> vector<16x128xf32>
    %c2_16 = arith.constant 2 : index
    %c0_17 = arith.constant 0 : index
    %23 = vector.load %arg3[%c2_16, %c0_17] : memref<8x128xf32, #tpu.memory_space<vmem>>, vector<1x128xf32>
    %24 = vector.broadcast %23 : vector<1x128xf32> to vector<16x128xf32>
    %25 = arith.addf %22, %24 : vector<16x128xf32>
    %cst_18 = arith.constant 0.000000e+00 : f32
    %26 = vector.broadcast %cst_18 : f32 to vector<16x128xf32>
    %27 = arith.maximumf %25, %26 : vector<16x128xf32>
    %28 = arith.truncf %27 : vector<16x128xf32> to vector<16x128xbf16>
    %c3 = arith.constant 3 : index
    %c0_19 = arith.constant 0 : index
    %c0_20 = arith.constant 0 : index
    %29 = vector.load %arg2[%c3, %c0_19, %c0_20] : memref<7x128x128xbf16, #tpu.memory_space<vmem>>, vector<1x128x128xbf16>
    %30 = vector.shape_cast %29 : vector<1x128x128xbf16> to vector<128x128xbf16>
    %cst_21 = arith.constant dense<0.000000e+00> : vector<16x128xf32>
    %31 = tpu.matmul %28, %30, %cst_21 {dimension_numbers = #tpu.dot_dimension_numbers<[1], [0], [0], [1], [0, 0, 1, 1], [], []>} : vector<16x128xbf16>, vector<128x128xbf16>, vector<16x128xf32> -> vector<16x128xf32>
    %c3_22 = arith.constant 3 : index
    %c0_23 = arith.constant 0 : index
    %32 = vector.load %arg3[%c3_22, %c0_23] : memref<8x128xf32, #tpu.memory_space<vmem>>, vector<1x128xf32>
    %33 = vector.broadcast %32 : vector<1x128xf32> to vector<16x128xf32>
    %34 = arith.addf %31, %33 : vector<16x128xf32>
    %cst_24 = arith.constant 0.000000e+00 : f32
    %35 = vector.broadcast %cst_24 : f32 to vector<16x128xf32>
    %36 = arith.maximumf %34, %35 : vector<16x128xf32>
    %37 = arith.truncf %36 : vector<16x128xf32> to vector<16x128xbf16>
    %c4 = arith.constant 4 : index
    %c0_25 = arith.constant 0 : index
    %c0_26 = arith.constant 0 : index
    %38 = vector.load %arg2[%c4, %c0_25, %c0_26] : memref<7x128x128xbf16, #tpu.memory_space<vmem>>, vector<1x128x128xbf16>
    %39 = vector.shape_cast %38 : vector<1x128x128xbf16> to vector<128x128xbf16>
    %cst_27 = arith.constant dense<0.000000e+00> : vector<16x128xf32>
    %40 = tpu.matmul %37, %39, %cst_27 {dimension_numbers = #tpu.dot_dimension_numbers<[1], [0], [0], [1], [0, 0, 1, 1], [], []>} : vector<16x128xbf16>, vector<128x128xbf16>, vector<16x128xf32> -> vector<16x128xf32>
    %c4_28 = arith.constant 4 : index
    %c0_29 = arith.constant 0 : index
    %41 = vector.load %arg3[%c4_28, %c0_29] : memref<8x128xf32, #tpu.memory_space<vmem>>, vector<1x128xf32>
    %42 = vector.broadcast %41 : vector<1x128xf32> to vector<16x128xf32>
    %43 = arith.addf %40, %42 : vector<16x128xf32>
    %cst_30 = arith.constant 0.000000e+00 : f32
    %44 = vector.broadcast %cst_30 : f32 to vector<16x128xf32>
    %45 = arith.maximumf %43, %44 : vector<16x128xf32>
    %46 = arith.truncf %45 : vector<16x128xf32> to vector<16x128xbf16>
    %c5 = arith.constant 5 : index
    %c0_31 = arith.constant 0 : index
    %c0_32 = arith.constant 0 : index
    %47 = vector.load %arg2[%c5, %c0_31, %c0_32] : memref<7x128x128xbf16, #tpu.memory_space<vmem>>, vector<1x128x128xbf16>
    %48 = vector.shape_cast %47 : vector<1x128x128xbf16> to vector<128x128xbf16>
    %cst_33 = arith.constant dense<0.000000e+00> : vector<16x128xf32>
    %49 = tpu.matmul %46, %48, %cst_33 {dimension_numbers = #tpu.dot_dimension_numbers<[1], [0], [0], [1], [0, 0, 1, 1], [], []>} : vector<16x128xbf16>, vector<128x128xbf16>, vector<16x128xf32> -> vector<16x128xf32>
    %c5_34 = arith.constant 5 : index
    %c0_35 = arith.constant 0 : index
    %50 = vector.load %arg3[%c5_34, %c0_35] : memref<8x128xf32, #tpu.memory_space<vmem>>, vector<1x128xf32>
    %51 = vector.broadcast %50 : vector<1x128xf32> to vector<16x128xf32>
    %52 = arith.addf %49, %51 : vector<16x128xf32>
    %cst_36 = arith.constant 0.000000e+00 : f32
    %53 = vector.broadcast %cst_36 : f32 to vector<16x128xf32>
    %54 = arith.maximumf %52, %53 : vector<16x128xf32>
    %55 = arith.truncf %54 : vector<16x128xf32> to vector<16x128xbf16>
    %c6 = arith.constant 6 : index
    %c0_37 = arith.constant 0 : index
    %c0_38 = arith.constant 0 : index
    %56 = vector.load %arg2[%c6, %c0_37, %c0_38] : memref<7x128x128xbf16, #tpu.memory_space<vmem>>, vector<1x128x128xbf16>
    %57 = vector.shape_cast %56 : vector<1x128x128xbf16> to vector<128x128xbf16>
    %cst_39 = arith.constant dense<0.000000e+00> : vector<16x128xf32>
    %58 = tpu.matmul %55, %57, %cst_39 {dimension_numbers = #tpu.dot_dimension_numbers<[1], [0], [0], [1], [0, 0, 1, 1], [], []>} : vector<16x128xbf16>, vector<128x128xbf16>, vector<16x128xf32> -> vector<16x128xf32>
    %c6_40 = arith.constant 6 : index
    %c0_41 = arith.constant 0 : index
    %59 = vector.load %arg3[%c6_40, %c0_41] : memref<8x128xf32, #tpu.memory_space<vmem>>, vector<1x128xf32>
    %60 = vector.broadcast %59 : vector<1x128xf32> to vector<16x128xf32>
    %61 = arith.addf %58, %60 : vector<16x128xf32>
    %cst_42 = arith.constant dense<0xFF800000> : vector<16xf32>
    %62 = vector.multi_reduction <maximumf>, %61, %cst_42 [1] : vector<16x128xf32> to vector<16xf32>
    %63 = vector.shape_cast %62 : vector<16xf32> to vector<16x1xf32>
    %64 = vector.broadcast %63 : vector<16x1xf32> to vector<16x128xf32>
    %65 = arith.subf %61, %64 : vector<16x128xf32>
    %66 = math.exp %65 : vector<16x128xf32>
    %cst_43 = arith.constant dense<0.000000e+00> : vector<16xf32>
    %67 = vector.multi_reduction <add>, %66, %cst_43 [1] : vector<16x128xf32> to vector<16xf32>
    %68 = vector.shape_cast %67 : vector<16xf32> to vector<16x1xf32>
    %69 = tpu.reciprocal %68 {approx = true} : vector<16x1xf32> -> vector<16x1xf32>
    %70 = vector.broadcast %69 : vector<16x1xf32> to vector<16x128xf32>
    %71 = arith.mulf %66, %70 : vector<16x128xf32>
    %c0_44 = arith.constant 0 : index
    %c0_45 = arith.constant 0 : index
    %72 = vector.load %arg4[%c0_44, %c0_45] : memref<16x128xf32, #tpu.memory_space<vmem>>, vector<16x128xf32>
    tpu.vector_store %arg4[%c0_44, %c0_45], %71 {strides = array<i32>} : memref<16x128xf32, #tpu.memory_space<vmem>>, vector<16x128xf32>,
    return
  }
  func.func @transform_0(%arg0: i32) -> (i32, i32) {
    %c0_i32 = arith.constant 0 : i32
    %c0_i32_0 = arith.constant 0 : i32
    return %arg0, %c0_i32 : i32, i32
  }
  func.func @transform_1(%arg0: i32) -> (i32, i32, i32) {
    %c0_i32 = arith.constant 0 : i32
    %c0_i32_0 = arith.constant 0 : i32
    %c0_i32_1 = arith.constant 0 : i32
    %c0_i32_2 = arith.constant 0 : i32
    return %c0_i32, %c0_i32_0, %c0_i32_1 : i32, i32, i32
  }
  func.func @transform_2(%arg0: i32) -> (i32, i32) {
    %c0_i32 = arith.constant 0 : i32
    %c0_i32_0 = arith.constant 0 : i32
    %c0_i32_1 = arith.constant 0 : i32
    return %c0_i32, %c0_i32_0 : i32, i32
  }
  func.func @transform_3(%arg0: i32) -> (i32, i32) {
    %c0_i32 = arith.constant 0 : i32
    %c0_i32_0 = arith.constant 0 : i32
    return %arg0, %c0_i32 : i32, i32
  }
}

</mosaic_0001>

<llo_original>
// kernel: tpu_custom_call.1
$region0: #{tpu_custom_call.1}
  #allocation0 [shape = 'u32[]', space=smem, size = 0x4, offset = 0x4, fixed_abs, tag = 'smem constant byte address 0x4 - core index']
  #allocation1 [shape = 'u32[72,128]{1,0:T(1,128)}', space=vmem, size = 0x9000, scoped, tag = 'internal scratch']
  %s0 = inlined_call_operand.hbm [shape: f32[16,128], index: 0, kind: input, shape index: {}]
  %s1 = inlined_call_operand.hbm [shape: bf16[7,128,128], index: 1, kind: input, shape index: {}]
  %s2 = inlined_call_operand.hbm [shape: f32[8,128], index: 2, kind: input, shape index: {}]
  %s3 = inlined_call_operand.hbm [shape: f32[16,128], index: 3, kind: output, shape index: {}]
  %s4 = sld [smem:[#allocation0]]
  $region34: #{tpu_custom_call.1} parent=0
    _
  %s6 = ssub.s32 1, %s4
  %s7 = scalar_select 0, %s6, %s4
  $region1: #{tpu_custom_call.1} parent=0
    #allocation2 [shape = 'u8[8192]{0}', space=vmem, size = 0x2000, scoped, tag = 'input window, operand 0, single buffered']
    #allocation3 [shape = 's32[1]{0}', space=sflag, size = 0x4, scoped, tag = 'scoped memory for tpu_custom_call.1']
    #allocation4 [shape = 's32[1]{0}', space=sflag, size = 0x4, scoped, tag = 'scoped memory for tpu_custom_call.1']
    #allocation5 [shape = 'u8[229376]{0}', space=vmem, size = 0x38000, scoped, tag = 'input window, operand 1, single buffered']
    #allocation6 [shape = 's32[1]{0}', space=sflag, size = 0x4, scoped, tag = 'scoped memory for tpu_custom_call.1']
    #allocation7 [shape = 'u8[4096]{0}', space=vmem, size = 0x1000, scoped, tag = 'input window, operand 2, single buffered']
    #allocation8 [shape = 'u8[8192]{0}', space=vmem, size = 0x2000, scoped, tag = 'output window, operand 0, single buffered']
    %8 = vsyncpa [#allocation3], 0
    %9 = vsyncpa [#allocation6], 0
    %10 = vsyncpa [#allocation4], 0
    // Predicated region
    $region2: #{tpu_custom_call.1} parent=1 // pred_check
      _
    $region3: #{tpu_custom_call.1} parent=1 // pred_check_branch
      %12 = sbr.rel (0) target = $region5
    $region4: #{tpu_custom_call.1} parent=1 // pred_region
      %14 = vsyncadd [#allocation3], 0
      %s15 = sshll.u32 %s0, 4
      %s16 = int_to_ptr.hbm [resolvable:$true] %s15
      %s17 = sshll.u32 [#allocation2], 4
      %s18 = int_to_ptr.vmem [resolvable:$true] %s17
      %23 = dma.hbm_to_vmem [thread:$0]  %s16, 256, %s18, [#allocation3], 128, 128, 8
    $region5: #{tpu_custom_call.1} parent=1 // pred_fallthru
      _
    // Predicated region
    $region6: #{tpu_custom_call.1} parent=1 // pred_check
      _
    $region7: #{tpu_custom_call.1} parent=1 // pred_check_branch
      %25 = sbr.rel (0) target = $region9
    $region8: #{tpu_custom_call.1} parent=1 // pred_region
      %27 = vsyncadd [#allocation6], 0
      %s28 = sshll.u32 %s1, 4
      %s29 = int_to_ptr.hbm [resolvable:$true] %s28
      %s30 = sshll.u32 [#allocation5], 4
      %s31 = int_to_ptr.vmem [resolvable:$true] %s30
      %36 = dma.hbm_to_vmem [thread:$0]  %s29, 7168, %s31, [#allocation6], 64, 64, 4
    $region9: #{tpu_custom_call.1} parent=1 // pred_fallthru
      _
    // Predicated region
    $region10: #{tpu_custom_call.1} parent=1 // pred_check
      _
    $region11: #{tpu_custom_call.1} parent=1 // pred_check_branch
      %38 = sbr.rel (0) target = $region13
    $region12: #{tpu_custom_call.1} parent=1 // pred_region
      %40 = vsyncadd [#allocation6], 0
      %s42 = sshll.u32 %s2, 4
      %s43 = int_to_ptr.hbm [resolvable:$true] %s42
      %s44 = sshll.u32 [#allocation7], 4
      %s45 = int_to_ptr.vmem [resolvable:$true] %s44
      %47 = dma.hbm_to_vmem [thread:$0]  %s43, 128, %s45, [#allocation6]
    $region13: #{tpu_custom_call.1} parent=1 // pred_fallthru
      _
    // Predicated region
    $region14: #{tpu_custom_call.1} parent=1 // pred_check
      _
    $region15: #{tpu_custom_call.1} parent=1 // pred_check_branch
      %49 = sbr.rel (0) target = $region17
    $region16: #{tpu_custom_call.1} parent=1 // pred_region
      %51 = dma.done [#allocation3], 256
    $region17: #{tpu_custom_call.1} parent=1 // pred_fallthru
      _
    // Predicated region
    $region18: #{tpu_custom_call.1} parent=1 // pred_check
      _
    $region19: #{tpu_custom_call.1} parent=1 // pred_check_branch
      %53 = sbr.rel (0) target = $region21
    $region20: #{tpu_custom_call.1} parent=1 // pred_region
      %55 = dma.done [#allocation6], 7168
    $region21: #{tpu_custom_call.1} parent=1 // pred_fallthru
      _
    // Predicated region
    $region22: #{tpu_custom_call.1} parent=1 // pred_check
      _
    $region23: #{tpu_custom_call.1} parent=1 // pred_check_branch
      %57 = sbr.rel (0) target = $region25
    $region24: #{tpu_custom_call.1} parent=1 // pred_region
      %59 = dma.done [#allocation6], 128
    $region25: #{tpu_custom_call.1} parent=1 // pred_fallthru
      _
    %v60 = vld [vmem:[#allocation2] sm:$0xff]
    %v61 = vld [vmem:[#allocation2 + $0x8] sm:$0xff]
    %v62 = vpack.c.bf16 %v61, %v60
    %v63 = vld [vmem:[#allocation5] sm:$0xf]
    %v64 = vld [vmem:[#allocation5 + $0x4] sm:$0xf]
    %v65 = vld [vmem:[#allocation5 + $0x8] sm:$0xf]
    %v66 = vld [vmem:[#allocation5 + $0xc] sm:$0xf]
    %v67 = vld [vmem:[#allocation5 + $0x10] sm:$0xf]
    %v68 = vld [vmem:[#allocation5 + $0x14] sm:$0xf]
    %v69 = vld [vmem:[#allocation5 + $0x18] sm:$0xf]
    %v70 = vld [vmem:[#allocation5 + $0x1c] sm:$0xf]
    %v71 = vld [vmem:[#allocation5 + $0x20] sm:$0xf]
    %v72 = vld [vmem:[#allocation5 + $0x24] sm:$0xf]
    %v73 = vld [vmem:[#allocation5 + $0x28] sm:$0xf]
    %v74 = vld [vmem:[#allocation5 + $0x2c] sm:$0xf]
    %v75 = vld [vmem:[#allocation5 + $0x30] sm:$0xf]
    %v76 = vld [vmem:[#allocation5 + $0x34] sm:$0xf]
    %v77 = vld [vmem:[#allocation5 + $0x38] sm:$0xf]
    %v78 = vld [vmem:[#allocation5 + $0x3c] sm:$0xf]
    %v79 = vld [vmem:[#allocation7] sm:$0x1]
    %v80 = vperm.slane %v79, 0
    %v97 = vunpack.c.l.b16 %v63
    %v98 = vunpack.c.l.b16 %v64
    %v99 = vunpack.c.l.b16 %v65
    %v100 = vunpack.c.l.b16 %v66
    %v101 = vunpack.c.l.b16 %v67
    %v102 = vunpack.c.l.b16 %v68
    %v103 = vunpack.c.l.b16 %v69
    %v104 = vunpack.c.l.b16 %v70
    %v105 = vunpack.c.l.b16 %v71
    %v106 = vunpack.c.l.b16 %v72
    %v107 = vunpack.c.l.b16 %v73
    %v108 = vunpack.c.l.b16 %v74
    %v109 = vunpack.c.l.b16 %v75
    %v110 = vunpack.c.l.b16 %v76
    %v111 = vunpack.c.l.b16 %v77
    %v112 = vunpack.c.l.b16 %v78
    %v113 = vpack.c.b16 %v98, %v97
    %v114 = vpack.c.b16 %v100, %v99
    %v115 = vpack.c.b16 %v102, %v101
    %v116 = vpack.c.b16 %v104, %v103
    %v117 = vpack.c.b16 %v106, %v105
    %v118 = vpack.c.b16 %v108, %v107
    %v119 = vpack.c.b16 %v110, %v109
    %v120 = vpack.c.b16 %v112, %v111
    %129 = vmatpush.bf16.msra.mxu0 %v120
    %130 = vmatpush.bf16.msra.mxu0 %v119
    %131 = vmatpush.bf16.msra.mxu0 %v118
    %132 = vmatpush.bf16.msra.mxu0 %v117
    %133 = vmatpush.bf16.msra.mxu0 %v116
    %134 = vmatpush.bf16.msra.mxu0 %v115
    %135 = vmatpush.bf16.msra.mxu0 %v114
    %136 = vmatpush.bf16.msra.mxu0 %v113
    %137 = vmatmul.bf16.gmra.mxu0 %v62
    %v138 = vpop.f32.mrf.mxu0
    %v139 = vadd.f32 %v80, %v138
    %v140 = vpop.f32.mrf.mxu0
    %v141 = vadd.f32 %v80, %v140
    %142 = vdwg.mxu0
    %v143 = vmax.f32 %v139, 0.0
    %v144 = vmax.f32 %v141, 0.0
    %v145 = vpack.c.bf16 %v144, %v143
    %s146 = scalar_lea.vmem [#allocation5], 64
    %v147 = vld [vmem:[%s146] sm:$0xf]
    %v148 = vld [vmem:[%s146 + $0x4] sm:$0xf]
    %v149 = vld [vmem:[%s146 + $0x8] sm:$0xf]
    %v150 = vld [vmem:[%s146 + $0xc] sm:$0xf]
    %v151 = vld [vmem:[%s146 + $0x10] sm:$0xf]
    %v152 = vld [vmem:[%s146 + $0x14] sm:$0xf]
    %v153 = vld [vmem:[%s146 + $0x18] sm:$0xf]
    %v154 = vld [vmem:[%s146 + $0x1c] sm:$0xf]
    %v155 = vld [vmem:[%s146 + $0x20] sm:$0xf]
    %v156 = vld [vmem:[%s146 + $0x24] sm:$0xf]
    %v157 = vld [vmem:[%s146 + $0x28] sm:$0xf]
    %v158 = vld [vmem:[%s146 + $0x2c] sm:$0xf]
    %v159 = vld [vmem:[%s146 + $0x30] sm:$0xf]
    %v160 = vld [vmem:[%s146 + $0x34] sm:$0xf]
    %v161 = vld [vmem:[%s146 + $0x38] sm:$0xf]
    %v162 = vld [vmem:[%s146 + $0x3c] sm:$0xf]
    %v163 = vld [vmem:[#allocation7 + $0x1] sm:$0x1]
    %v164 = vperm.slane %v163, 0
    %v181 = vunpack.c.l.b16 %v147
    %v182 = vunpack.c.l.b16 %v148
    %v183 = vunpack.c.l.b16 %v149
    %v184 = vunpack.c.l.b16 %v150
    %v185 = vunpack.c.l.b16 %v151
    %v186 = vunpack.c.l.b16 %v152
    %v187 = vunpack.c.l.b16 %v153
    %v188 = vunpack.c.l.b16 %v154
    %v189 = vunpack.c.l.b16 %v155
    %v190 = vunpack.c.l.b16 %v156
    %v191 = vunpack.c.l.b16 %v157
    %v192 = vunpack.c.l.b16 %v158
    %v193 = vunpack.c.l.b16 %v159
    %v194 = vunpack.c.l.b16 %v160
    %v195 = vunpack.c.l.b16 %v161
    %v196 = vunpack.c.l.b16 %v162
    %v197 = vpack.c.b16 %v182, %v181
    %v198 = vpack.c.b16 %v184, %v183
    %v199 = vpack.c.b16 %v186, %v185
    %v200 = vpack.c.b16 %v188, %v187
    %v201 = vpack.c.b16 %v190, %v189
    %v202 = vpack.c.b16 %v192, %v191
    %v203 = vpack.c.b16 %v194, %v193
    %v204 = vpack.c.b16 %v196, %v195
    %213 = vmatpush.bf16.msra.mxu0 %v204
    %214 = vmatpush.bf16.msra.mxu0 %v203
    %215 = vmatpush.bf16.msra.mxu0 %v202
    %216 = vmatpush.bf16.msra.mxu0 %v201
    %217 = vmatpush.bf16.msra.mxu0 %v200
    %218 = vmatpush.bf16.msra.mxu0 %v199
    %219 = vmatpush.bf16.msra.mxu0 %v198
    %220 = vmatpush.bf16.msra.mxu0 %v197
    %221 = vmatmul.bf16.gmra.mxu0 %v145
    %v222 = vpop.f32.mrf.mxu0
    %v223 = vadd.f32 %v164, %v222
    %v224 = vpop.f32.mrf.mxu0
    %v225 = vadd.f32 %v164, %v224
    %226 = vdwg.mxu0
    %v227 = vmax.f32 %v223, 0.0
    %v228 = vmax.f32 %v225, 0.0
    %v229 = vpack.c.bf16 %v228, %v227
    %s230 = scalar_lea.vmem [#allocation5], 128
    %v231 = vld [vmem:[%s230] sm:$0xf]
    %v232 = vld [vmem:[%s230 + $0x4] sm:$0xf]
    %v233 = vld [vmem:[%s230 + $0x8] sm:$0xf]
    %v234 = vld [vmem:[%s230 + $0xc] sm:$0xf]
    %v235 = vld [vmem:[%s230 + $0x10] sm:$0xf]
    %v236 = vld [vmem:[%s230 + $0x14] sm:$0xf]
    %v237 = vld [vmem:[%s230 + $0x18] sm:$0xf]
    %v238 = vld [vmem:[%s230 + $0x1c] sm:$0xf]
    %v239 = vld [vmem:[%s230 + $0x20] sm:$0xf]
    %v240 = vld [vmem:[%s230 + $0x24] sm:$0xf]
    %v241 = vld [vmem:[%s230 + $0x28] sm:$0xf]
    %v242 = vld [vmem:[%s230 + $0x2c] sm:$0xf]
    %v243 = vld [vmem:[%s230 + $0x30] sm:$0xf]
    %v244 = vld [vmem:[%s230 + $0x34] sm:$0xf]
    %v245 = vld [vmem:[%s230 + $0x38] sm:$0xf]
    %v246 = vld [vmem:[%s230 + $0x3c] sm:$0xf]
    %v247 = vld [vmem:[#allocation7 + $0x2] sm:$0x1]
    %v248 = vperm.slane %v247, 0
    %v265 = vunpack.c.l.b16 %v231
    %v266 = vunpack.c.l.b16 %v232
    %v267 = vunpack.c.l.b16 %v233
    %v268 = vunpack.c.l.b16 %v234
    %v269 = vunpack.c.l.b16 %v235
    %v270 = vunpack.c.l.b16 %v236
    %v271 = vunpack.c.l.b16 %v237
    %v272 = vunpack.c.l.b16 %v238
    %v273 = vunpack.c.l.b16 %v239
    %v274 = vunpack.c.l.b16 %v240
    %v275 = vunpack.c.l.b16 %v241
    %v276 = vunpack.c.l.b16 %v242
    %v277 = vunpack.c.l.b16 %v243
    %v278 = vunpack.c.l.b16 %v244
    %v279 = vunpack.c.l.b16 %v245
    %v280 = vunpack.c.l.b16 %v246
    %v281 = vpack.c.b16 %v266, %v265
    %v282 = vpack.c.b16 %v268, %v267
    %v283 = vpack.c.b16 %v270, %v269
    %v284 = vpack.c.b16 %v272, %v271
    %v285 = vpack.c.b16 %v274, %v273
    %v286 = vpack.c.b16 %v276, %v275
    %v287 = vpack.c.b16 %v278, %v277
    %v288 = vpack.c.b16 %v280, %v279
    %297 = vmatpush.bf16.msra.mxu0 %v288
    %298 = vmatpush.bf16.msra.mxu0 %v287
    %299 = vmatpush.bf16.msra.mxu0 %v286
    %300 = vmatpush.bf16.msra.mxu0 %v285
    %301 = vmatpush.bf16.msra.mxu0 %v284
    %302 = vmatpush.bf16.msra.mxu0 %v283
    %303 = vmatpush.bf16.msra.mxu0 %v282
    %304 = vmatpush.bf16.msra.mxu0 %v281
    %305 = vmatmul.bf16.gmra.mxu0 %v229
    %v306 = vpop.f32.mrf.mxu0
    %v307 = vadd.f32 %v248, %v306
    %v308 = vpop.f32.mrf.mxu0
    %v309 = vadd.f32 %v248, %v308
    %310 = vdwg.mxu0
    %v311 = vmax.f32 %v307, 0.0
    %v312 = vmax.f32 %v309, 0.0
    %v313 = vpack.c.bf16 %v312, %v311
    %s314 = scalar_lea.vmem [#allocation5], 192
    %v315 = vld [vmem:[%s314] sm:$0xf]
    %v316 = vld [vmem:[%s314 + $0x4] sm:$0xf]
    %v317 = vld [vmem:[%s314 + $0x8] sm:$0xf]
    %v318 = vld [vmem:[%s314 + $0xc] sm:$0xf]
    %v319 = vld [vmem:[%s314 + $0x10] sm:$0xf]
    %v320 = vld [vmem:[%s314 + $0x14] sm:$0xf]
    %v321 = vld [vmem:[%s314 + $0x18] sm:$0xf]
    %v322 = vld [vmem:[%s314 + $0x1c] sm:$0xf]
    %v323 = vld [vmem:[%s314 + $0x20] sm:$0xf]
    %v324 = vld [vmem:[%s314 + $0x24] sm:$0xf]
    %v325 = vld [vmem:[%s314 + $0x28] sm:$0xf]
    %v326 = vld [vmem:[%s314 + $0x2c] sm:$0xf]
    %v327 = vld [vmem:[%s314 + $0x30] sm:$0xf]
    %v328 = vld [vmem:[%s314 + $0x34] sm:$0xf]
    %v329 = vld [vmem:[%s314 + $0x38] sm:$0xf]
    %v330 = vld [vmem:[%s314 + $0x3c] sm:$0xf]
    %v331 = vld [vmem:[#allocation7 + $0x3] sm:$0x1]
    %v332 = vperm.slane %v331, 0
    %v349 = vunpack.c.l.b16 %v315
    %v350 = vunpack.c.l.b16 %v316
    %v351 = vunpack.c.l.b16 %v317
    %v352 = vunpack.c.l.b16 %v318
    %v353 = vunpack.c.l.b16 %v319
    %v354 = vunpack.c.l.b16 %v320
    %v355 = vunpack.c.l.b16 %v321
    %v356 = vunpack.c.l.b16 %v322
    %v357 = vunpack.c.l.b16 %v323
    %v358 = vunpack.c.l.b16 %v324
    %v359 = vunpack.c.l.b16 %v325
    %v360 = vunpack.c.l.b16 %v326
    %v361 = vunpack.c.l.b16 %v327
    %v362 = vunpack.c.l.b16 %v328
    %v363 = vunpack.c.l.b16 %v329
    %v364 = vunpack.c.l.b16 %v330
    %v365 = vpack.c.b16 %v350, %v349
    %v366 = vpack.c.b16 %v352, %v351
    %v367 = vpack.c.b16 %v354, %v353
    %v368 = vpack.c.b16 %v356, %v355
    %v369 = vpack.c.b16 %v358, %v357
    %v370 = vpack.c.b16 %v360, %v359
    %v371 = vpack.c.b16 %v362, %v361
    %v372 = vpack.c.b16 %v364, %v363
    %381 = vmatpush.bf16.msra.mxu0 %v372
    %382 = vmatpush.bf16.msra.mxu0 %v371
    %383 = vmatpush.bf16.msra.mxu0 %v370
    %384 = vmatpush.bf16.msra.mxu0 %v369
    %385 = vmatpush.bf16.msra.mxu0 %v368
    %386 = vmatpush.bf16.msra.mxu0 %v367
    %387 = vmatpush.bf16.msra.mxu0 %v366
    %388 = vmatpush.bf16.msra.mxu0 %v365
    %389 = vmatmul.bf16.gmra.mxu0 %v313
    %v390 = vpop.f32.mrf.mxu0
    %v391 = vadd.f32 %v332, %v390
    %v392 = vpop.f32.mrf.mxu0
    %v393 = vadd.f32 %v332, %v392
    %394 = vdwg.mxu0
    %v395 = vmax.f32 %v391, 0.0
    %v396 = vmax.f32 %v393, 0.0
    %v397 = vpack.c.bf16 %v396, %v395
    %s398 = scalar_lea.vmem [#allocation5], 256
    %v399 = vld [vmem:[%s398] sm:$0xf]
    %v400 = vld [vmem:[%s398 + $0x4] sm:$0xf]
    %v401 = vld [vmem:[%s398 + $0x8] sm:$0xf]
    %v402 = vld [vmem:[%s398 + $0xc] sm:$0xf]
    %v403 = vld [vmem:[%s398 + $0x10] sm:$0xf]
    %v404 = vld [vmem:[%s398 + $0x14] sm:$0xf]
    %v405 = vld [vmem:[%s398 + $0x18] sm:$0xf]
    %v406 = vld [vmem:[%s398 + $0x1c] sm:$0xf]
    %v407 = vld [vmem:[%s398 + $0x20] sm:$0xf]
    %v408 = vld [vmem:[%s398 + $0x24] sm:$0xf]
    %v409 = vld [vmem:[%s398 + $0x28] sm:$0xf]
    %v410 = vld [vmem:[%s398 + $0x2c] sm:$0xf]
    %v411 = vld [vmem:[%s398 + $0x30] sm:$0xf]
    %v412 = vld [vmem:[%s398 + $0x34] sm:$0xf]
    %v413 = vld [vmem:[%s398 + $0x38] sm:$0xf]
    %v414 = vld [vmem:[%s398 + $0x3c] sm:$0xf]
    %v415 = vld [vmem:[#allocation7 + $0x4] sm:$0x1]
    %v416 = vperm.slane %v415, 0
    %v433 = vunpack.c.l.b16 %v399
    %v434 = vunpack.c.l.b16 %v400
    %v435 = vunpack.c.l.b16 %v401
    %v436 = vunpack.c.l.b16 %v402
    %v437 = vunpack.c.l.b16 %v403
    %v438 = vunpack.c.l.b16 %v404
    %v439 = vunpack.c.l.b16 %v405
    %v440 = vunpack.c.l.b16 %v406
    %v441 = vunpack.c.l.b16 %v407
    %v442 = vunpack.c.l.b16 %v408
    %v443 = vunpack.c.l.b16 %v409
    %v444 = vunpack.c.l.b16 %v410
    %v445 = vunpack.c.l.b16 %v411
    %v446 = vunpack.c.l.b16 %v412
    %v447 = vunpack.c.l.b16 %v413
    %v448 = vunpack.c.l.b16 %v414
    %v449 = vpack.c.b16 %v434, %v433
    %v450 = vpack.c.b16 %v436, %v435
    %v451 = vpack.c.b16 %v438, %v437
    %v452 = vpack.c.b16 %v440, %v439
    %v453 = vpack.c.b16 %v442, %v441
    %v454 = vpack.c.b16 %v444, %v443
    %v455 = vpack.c.b16 %v446, %v445
    %v456 = vpack.c.b16 %v448, %v447
    %465 = vmatpush.bf16.msra.mxu0 %v456
    %466 = vmatpush.bf16.msra.mxu0 %v455
    %467 = vmatpush.bf16.msra.mxu0 %v454
    %468 = vmatpush.bf16.msra.mxu0 %v453
    %469 = vmatpush.bf16.msra.mxu0 %v452
    %470 = vmatpush.bf16.msra.mxu0 %v451
    %471 = vmatpush.bf16.msra.mxu0 %v450
    %472 = vmatpush.bf16.msra.mxu0 %v449
    %473 = vmatmul.bf16.gmra.mxu0 %v397
    %v474 = vpop.f32.mrf.mxu0
    %v475 = vadd.f32 %v416, %v474
    %v476 = vpop.f32.mrf.mxu0
    %v477 = vadd.f32 %v416, %v476
    %478 = vdwg.mxu0
    %v479 = vmax.f32 %v475, 0.0
    %v480 = vmax.f32 %v477, 0.0
    %v481 = vpack.c.bf16 %v480, %v479
    %s482 = scalar_lea.vmem [#allocation5], 320
    %v483 = vld [vmem:[%s482] sm:$0xf]
    %v484 = vld [vmem:[%s482 + $0x4] sm:$0xf]
    %v485 = vld [vmem:[%s482 + $0x8] sm:$0xf]
    %v486 = vld [vmem:[%s482 + $0xc] sm:$0xf]
    %v487 = vld [vmem:[%s482 + $0x10] sm:$0xf]
    %v488 = vld [vmem:[%s482 + $0x14] sm:$0xf]
    %v489 = vld [vmem:[%s482 + $0x18] sm:$0xf]
    %v490 = vld [vmem:[%s482 + $0x1c] sm:$0xf]
    %v491 = vld [vmem:[%s482 + $0x20] sm:$0xf]
    %v492 = vld [vmem:[%s482 + $0x24] sm:$0xf]
    %v493 = vld [vmem:[%s482 + $0x28] sm:$0xf]
    %v494 = vld [vmem:[%s482 + $0x2c] sm:$0xf]
    %v495 = vld [vmem:[%s482 + $0x30] sm:$0xf]
    %v496 = vld [vmem:[%s482 + $0x34] sm:$0xf]
    %v497 = vld [vmem:[%s482 + $0x38] sm:$0xf]
    %v498 = vld [vmem:[%s482 + $0x3c] sm:$0xf]
    %v499 = vld [vmem:[#allocation7 + $0x5] sm:$0x1]
    %v500 = vperm.slane %v499, 0
    %v517 = vunpack.c.l.b16 %v483
    %v518 = vunpack.c.l.b16 %v484
    %v519 = vunpack.c.l.b16 %v485
    %v520 = vunpack.c.l.b16 %v486
    %v521 = vunpack.c.l.b16 %v487
    %v522 = vunpack.c.l.b16 %v488
    %v523 = vunpack.c.l.b16 %v489
    %v524 = vunpack.c.l.b16 %v490
    %v525 = vunpack.c.l.b16 %v491
    %v526 = vunpack.c.l.b16 %v492
    %v527 = vunpack.c.l.b16 %v493
    %v528 = vunpack.c.l.b16 %v494
    %v529 = vunpack.c.l.b16 %v495
    %v530 = vunpack.c.l.b16 %v496
    %v531 = vunpack.c.l.b16 %v497
    %v532 = vunpack.c.l.b16 %v498
    %v533 = vpack.c.b16 %v518, %v517
    %v534 = vpack.c.b16 %v520, %v519
    %v535 = vpack.c.b16 %v522, %v521
    %v536 = vpack.c.b16 %v524, %v523
    %v537 = vpack.c.b16 %v526, %v525
    %v538 = vpack.c.b16 %v528, %v527
    %v539 = vpack.c.b16 %v530, %v529
    %v540 = vpack.c.b16 %v532, %v531
    %549 = vmatpush.bf16.msra.mxu0 %v540
    %550 = vmatpush.bf16.msra.mxu0 %v539
    %551 = vmatpush.bf16.msra.mxu0 %v538
    %552 = vmatpush.bf16.msra.mxu0 %v537
    %553 = vmatpush.bf16.msra.mxu0 %v536
    %554 = vmatpush.bf16.msra.mxu0 %v535
    %555 = vmatpush.bf16.msra.mxu0 %v534
    %556 = vmatpush.bf16.msra.mxu0 %v533
    %557 = vmatmul.bf16.gmra.mxu0 %v481
    %v558 = vpop.f32.mrf.mxu0
    %v559 = vadd.f32 %v500, %v558
    %v560 = vpop.f32.mrf.mxu0
    %v561 = vadd.f32 %v500, %v560
    %562 = vdwg.mxu0
    %v563 = vmax.f32 %v559, 0.0
    %v564 = vmax.f32 %v561, 0.0
    %v565 = vpack.c.bf16 %v564, %v563
    %s566 = scalar_lea.vmem [#allocation5], 384
    %v567 = vld [vmem:[%s566] sm:$0xf]
    %v568 = vld [vmem:[%s566 + $0x4] sm:$0xf]
    %v569 = vld [vmem:[%s566 + $0x8] sm:$0xf]
    %v570 = vld [vmem:[%s566 + $0xc] sm:$0xf]
    %v571 = vld [vmem:[%s566 + $0x10] sm:$0xf]
    %v572 = vld [vmem:[%s566 + $0x14] sm:$0xf]
    %v573 = vld [vmem:[%s566 + $0x18] sm:$0xf]
    %v574 = vld [vmem:[%s566 + $0x1c] sm:$0xf]
    %v575 = vld [vmem:[%s566 + $0x20] sm:$0xf]
    %v576 = vld [vmem:[%s566 + $0x24] sm:$0xf]
    %v577 = vld [vmem:[%s566 + $0x28] sm:$0xf]
    %v578 = vld [vmem:[%s566 + $0x2c] sm:$0xf]
    %v579 = vld [vmem:[%s566 + $0x30] sm:$0xf]
    %v580 = vld [vmem:[%s566 + $0x34] sm:$0xf]
    %v581 = vld [vmem:[%s566 + $0x38] sm:$0xf]
    %v582 = vld [vmem:[%s566 + $0x3c] sm:$0xf]
    %v583 = vld [vmem:[#allocation7 + $0x6] sm:$0x1]
    %v584 = vperm.slane %v583, 0
    %v601 = vunpack.c.l.b16 %v567
    %v602 = vunpack.c.l.b16 %v568
    %v603 = vunpack.c.l.b16 %v569
    %v604 = vunpack.c.l.b16 %v570
    %v605 = vunpack.c.l.b16 %v571
    %v606 = vunpack.c.l.b16 %v572
    %v607 = vunpack.c.l.b16 %v573
    %v608 = vunpack.c.l.b16 %v574
    %v609 = vunpack.c.l.b16 %v575
    %v610 = vunpack.c.l.b16 %v576
    %v611 = vunpack.c.l.b16 %v577
    %v612 = vunpack.c.l.b16 %v578
    %v613 = vunpack.c.l.b16 %v579
    %v614 = vunpack.c.l.b16 %v580
    %v615 = vunpack.c.l.b16 %v581
    %v616 = vunpack.c.l.b16 %v582
    %v617 = vpack.c.b16 %v602, %v601
    %v618 = vpack.c.b16 %v604, %v603
    %v619 = vpack.c.b16 %v606, %v605
    %v620 = vpack.c.b16 %v608, %v607
    %v621 = vpack.c.b16 %v610, %v609
    %v622 = vpack.c.b16 %v612, %v611
    %v623 = vpack.c.b16 %v614, %v613
    %v624 = vpack.c.b16 %v616, %v615
    %633 = vmatpush.bf16.msra.mxu0 %v624
    %634 = vmatpush.bf16.msra.mxu0 %v623
    %635 = vmatpush.bf16.msra.mxu0 %v622
    %636 = vmatpush.bf16.msra.mxu0 %v621
    %637 = vmatpush.bf16.msra.mxu0 %v620
    %638 = vmatpush.bf16.msra.mxu0 %v619
    %639 = vmatpush.bf16.msra.mxu0 %v618
    %640 = vmatpush.bf16.msra.mxu0 %v617
    %641 = vmatmul.bf16.gmra.mxu0 %v565
    %v642 = vpop.f32.mrf.mxu0
    %v643 = vadd.f32 %v584, %v642
    %v644 = vpop.f32.mrf.mxu0
    %v645 = vadd.f32 %v584, %v644
    %646 = vdwg.mxu0
    %647 = vmax.xlane.f32.xlu0 %v643
    %v648 = vpop.xlane.xlu0 %647
    %649 = vmax.xlane.f32.xlu0 %v645
    %v650 = vpop.xlane.xlu0 %649
    %v651 = vsub.f32 %v643, %v648
    %v652 = vsub.f32 %v645, %v650
    %v653 = vmul.f32 %v651, 1.442695
    %v654 = vpow.pop %v653
    %v655 = vmul.f32 %v652, 1.442695
    %v656 = vpow.pop %v655
    %657 = vadd.xlane.f32.xlu0 %v654
    %v658 = vpop.xlane.xlu0 %657
    %659 = vadd.xlane.f32.xlu0 %v656
    %v660 = vpop.xlane.xlu0 %659
    %v661 = vrcp.pop %v658
    %v662 = vrcp.pop %v660
    %v663 = vmul.f32 %v654, %v661
    %v664 = vmul.f32 %v656, %v662
    %665 = vst [vmem:[#allocation8] sm:$0xff] %v663
    %666 = vst [vmem:[#allocation8 + $0x8] sm:$0xff] %v664
    // Predicated region
    $region26: #{tpu_custom_call.1} parent=1 // pred_check
      _
    $region27: #{tpu_custom_call.1} parent=1 // pred_check_branch
      %668 = sbr.rel (0) target = $region29
    $region28: #{tpu_custom_call.1} parent=1 // pred_region
      %670 = vsyncadd [#allocation4], 0
      %s671 = sshll.u32 [#allocation8], 4
      %s672 = int_to_ptr.vmem [resolvable:$true] %s671
      %s673 = sshll.u32 %s3, 4
      %s674 = int_to_ptr.hbm [resolvable:$true] %s673
      %679 = dma.vmem_to_hbm [thread:$0]  %s672, 256, %s674, [#allocation4], 128, 128, 8
    $region29: #{tpu_custom_call.1} parent=1 // pred_fallthru
      _
    // Predicated region
    $region30: #{tpu_custom_call.1} parent=1 // pred_check
      _
    $region31: #{tpu_custom_call.1} parent=1 // pred_check_branch
      %681 = sbr.rel (0) target = $region33
    $region32: #{tpu_custom_call.1} parent=1 // pred_region
      %683 = dma.done [#allocation4], 256
    $region33: #{tpu_custom_call.1} parent=1 // pred_fallthru
      _
    %684 = vsyncpa [#allocation3], 1
    %685 = vsyncpa [#allocation6], 1
    %686 = vsyncpa [#allocation4], 1

</llo_original>
